<compile_context>
chip_gen: v7x
topology: tpu7x:2x2x1
jax: 0.10.0
libtpu: 0.0.40
codegen_flags: <defaults>
</compile_context>

<pallas_src>
import jax
import jax.numpy as jnp
from jax.experimental import pallas as pl
from jax.experimental.pallas import tpu as pltpu

BN_EPS = 1e-5
LANE = 128


def _conv_plane(x_ref, w_ref, co):
    """Channel plane `co` of y = W @ x as dense (nb, sb, 128) VPU FMAs."""
    c_in = w_ref.shape[1]
    acc = w_ref[co, 0] * x_ref[:, 0, :, :]
    for ci in range(1, c_in):
        acc = acc + w_ref[co, ci] * x_ref[:, ci, :, :]
    return acc
    # TODO(synk): for large C (>=128) replace the unrolled scalar FMAs with an
    # MXU jnp.dot path (channels on the contraction axis, spatial on lanes).


def stats_kernel(x_ref, w_ref, stats_ref):
    """Pass 1: per-batch-chunk partial sum(y) / sum(y*y) per channel, y = W@x."""
    # x_ref: (nb, C, sb, 128) VMEM; w_ref: (C, C) SMEM;
    # stats_ref: (1, C, 2) partial accumulator, resident across the spatial axis.
    @pl.when(pl.program_id(1) == 0)
    def _init():
        stats_ref[...] = jnp.zeros_like(stats_ref)

    c_out = w_ref.shape[0]
    s_rows, ss_rows = [], []
    for co in range(c_out):
        y = _conv_plane(x_ref, w_ref, co)                   # (nb, sb, 128)
        p = jnp.sum(y, axis=0)                              # (sb, 128)
        q = jnp.sum(y * y, axis=0)                          # (sb, 128)
        s_rows.append(jnp.sum(p, axis=0, keepdims=True))    # (1, 128)
        ss_rows.append(jnp.sum(q, axis=0, keepdims=True))   # (1, 128)
    s = jnp.sum(jnp.concatenate(s_rows, axis=0), axis=1, keepdims=True)    # (C,1)
    ss = jnp.sum(jnp.concatenate(ss_rows, axis=0), axis=1, keepdims=True)  # (C,1)
    stats_ref[0] = stats_ref[0] + jnp.concatenate([s, ss], axis=1)         # (C,2)


def apply_kernel(x_ref, w_ref, shift_ref, o_ref):
    """Pass 2: out = relu((scale*W) @ x + shift), one dense plane per channel."""
    # x_ref, o_ref: (nb, C, sb, 128) VMEM; w_ref: (C, C) SMEM (scale folded);
    # shift_ref: (C,) SMEM with shift = beta - mean * scale.
    c_out = w_ref.shape[0]
    for co in range(c_out):
        y = _conv_plane(x_ref, w_ref, co)                   # (nb, sb, 128)
        o_ref[:, co, :, :] = jnp.maximum(y + shift_ref[co], 0.0)


def _pick_block(n, c, sp, target_bytes):
    """Choose a block (nb, C, sb, 128) with nb*C*sb*128*4 ~= target_bytes.

    Returns (nb, sb, npad, sppad).  sb is either the full spatial extent or a
    multiple of 8, so the (8, 128) block-shape rule always holds; npad/sppad
    are the zero-padded extents the blocks divide evenly.
    """
    bytes_per_row = c * LANE * 4
    rows_target = max(1, target_bytes // bytes_per_row)
    if sp >= rows_target:
        nb = 1
        sb = min(sp, max(8, (rows_target // 8) * 8))        # 8-aligned spatial tile
    else:
        sb = sp                                             # full spatial per sample
        nb = max(1, min(n, target_bytes // max(1, bytes_per_row * sp)))
    sppad = -(-sp // sb) * sb
    npad = -(-n // nb) * nb
    return nb, sb, npad, sppad


def conv_block(x_nchw, w, b, gamma, beta, *, target_block_bytes=4 * 1024 * 1024,
               interpret=False):
    """ConvBlock forward. x_nchw: (N, C, H, W) f32; w: (C_out, C_in) 1x1 kernel.

    `b` (conv bias) is accepted for API parity but unused: it cancels exactly
    inside the training-mode BatchNorm mean/variance.
    """
    del b
    n, c, h, wdt = x_nchw.shape
    hw = h * wdt
    x = x_nchw.astype(jnp.float32).reshape(n, c, hw)
    w = w.astype(jnp.float32)

    # Pad spatial to a lane multiple: zeros add nothing to the bias-free conv
    # stats and padded outputs are sliced away -> unmasked full-width stores.
    hwp = -(-hw // LANE) * LANE
    if hwp != hw:
        x = jnp.pad(x, ((0, 0), (0, 0), (0, hwp - hw)))
    sp = hwp // LANE
    x4 = x.reshape(n, c, sp, LANE)   # free view; channel planes are dense slabs

    nb, sb, npad, sppad = _pick_block(n, c, sp, target_block_bytes)
    if npad != n or sppad != sp:
        x4 = jnp.pad(x4, ((0, npad - n), (0, 0), (0, sppad - sp), (0, 0)))
    n_chunks, n_sp = npad // nb, sppad // sb
    grid = (n_chunks, n_sp)

    x_spec = pl.BlockSpec((nb, c, sb, LANE), lambda i, t: (i, 0, t, 0))
    smem_spec = pl.BlockSpec(memory_space=pltpu.MemorySpace.SMEM)

    def _cp(sem):
        return pltpu.CompilerParams(dimension_semantics=sem,
                                    vmem_limit_bytes=48 * 1024 * 1024)

    # ---- Pass 1: per-chunk partial per-channel sum / sum-of-squares of W @ x.
    partials = pl.pallas_call(
        stats_kernel,
        out_shape=jax.ShapeDtypeStruct((n_chunks, c, 2), jnp.float32),
        grid=grid,
        in_specs=[x_spec, smem_spec],
        out_specs=pl.BlockSpec((1, c, 2), lambda i, t: (i, 0, 0)),
        compiler_params=_cp(("parallel", "arbitrary")),
        interpret=interpret,
    )(x4, w)

    # ---- Tiny (C,)-sized epilogue: reduce partials, BN -> scale/shift, fold
    # the scale into the conv weights so pass 2 is one FMA + max per element.
    # TODO(synk): E[y^2]-E[y]^2 in f32 can lose precision at very large N*H*W;
    # switch to per-chunk shifted partial sums if that regime matters.
    stats = jnp.sum(partials, axis=0)                       # (C, 2)
    count = jnp.float32(n * hw)                             # real (unpadded) count
    mean = stats[:, 0] / count
    var = jnp.maximum(stats[:, 1] / count - mean * mean, 0.0)
    scale = gamma.astype(jnp.float32) * jax.lax.rsqrt(var + BN_EPS)
    shift = beta.astype(jnp.float32) - mean * scale
    w_scaled = scale[:, None] * w

    # ---- Pass 2: out = relu((scale*W) @ x + shift), fully parallel tiles.
    # TODO(synk): add a VMEM-resident single-call fast path (keep y in scratch
    # during the stats sweep) when N*C*HW*4B fits in VMEM to save one x read.
    out4 = pl.pallas_call(
        apply_kernel,
        out_shape=jax.ShapeDtypeStruct((npad, c, sppad, LANE), jnp.float32),
        grid=grid,
        in_specs=[x_spec, smem_spec, smem_spec],
        out_specs=pl.BlockSpec((nb, c, sb, LANE), lambda i, t: (i, 0, t, 0)),
        compiler_params=_cp(("parallel", "parallel")),
        interpret=interpret,
    )(x4, w_scaled, shift)

    out = out4.reshape(npad, c, sppad * LANE)[:n, :, :hw]
    return out.reshape(n, c, h, wdt)


def conv_block_ref(x_nchw, w, b, gamma, beta):
    """Pure-JAX reference matching PyTorch ConvBlock.forward (training-mode BN)."""
    y = jnp.einsum("oc,nchw->nohw", w, x_nchw) + b[None, :, None, None]
    mean = jnp.mean(y, axis=(0, 2, 3), keepdims=True)
    var = jnp.mean((y - mean) ** 2, axis=(0, 2, 3), keepdims=True)
    y = (gamma[None, :, None, None] * (y - mean) / jnp.sqrt(var + BN_EPS)
         + beta[None, :, None, None])
    return jnp.maximum(y, 0.0)


if __name__ == "__main__":
    key = jax.random.PRNGKey(0)
    k_x, k_w, k_b, k_g, k_bt = jax.random.split(key, 5)

    N, C, H, W = 2, 4, 16, 16
    x = jax.random.normal(k_x, (N, C, H, W), dtype=jnp.float32)

    # Conv2d(C, C, kernel_size=1) parameters (kernel squeezed to (C_out, C_in)).
    w = jax.random.normal(k_w, (C, C), dtype=jnp.float32) * 0.5
    b = jax.random.normal(k_b, (C,), dtype=jnp.float32) * 0.1
    # BatchNorm2d(C) affine parameters (deterministic, nontrivial).
    gamma = 1.0 + 0.1 * jax.random.normal(k_g, (C,), dtype=jnp.float32)
    beta = 0.1 * jax.random.normal(k_bt, (C,), dtype=jnp.float32)

    out = jax.block_until_ready(conv_block(x, w, b, gamma, beta))
    ref = conv_block_ref(x, w, b, gamma, beta)

    assert out.shape == (N, C, H, W)
    assert jnp.allclose(out, ref, atol=1e-4, rtol=1e-4), "mismatch vs reference"

    print("KERNEL_OK")
</pallas_src>

<mosaic_0001>
module attributes {stable_mosaic.version = 11 : i64} {
  func.func @stats_kernel(%arg0: i32, %arg1: i32, %arg2: memref<2x4x2x128xf32, #tpu.memory_space<vmem>>, %arg3: memref<4x4xf32, #tpu.memory_space<smem>>, %arg4: memref<1x4x2xf32, #tpu.memory_space<vmem>>) attributes {dimension_semantics = [#tpu.dimension_semantics<parallel>, #tpu.dimension_semantics<arbitrary>], iteration_bounds = array<i64: 1, 1>, scalar_prefetch = 0 : i64, scratch_operands = 0 : i64, tpu.core_type = #tpu.core_type<tc>, window_params = [{transform_indices = @transform_0, window_bounds = array<i64: 2, 4, 2, 128>}, {transform_indices = @transform_1, window_bounds = array<i64: 4, 4>}, {transform_indices = @transform_2, window_bounds = array<i64: 1, 4, 2>}]} {
    %c0_i32 = arith.constant 0 : i32
    %0 = arith.cmpi eq, %arg1, %c0_i32 : i32
    %1 = arith.extui %0 : i1 to i32
    %c0_i32_0 = arith.constant 0 : i32
    %2 = arith.cmpi ne, %1, %c0_i32_0 : i32
    scf.if %2 {
      %cst_116 = arith.constant 0.000000e+00 : f32
      %136 = vector.broadcast %cst_116 : f32 to vector<1x4x2xf32>
      %c0_117 = arith.constant 0 : index
      %c0_118 = arith.constant 0 : index
      %c0_119 = arith.constant 0 : index
      %137 = vector.load %arg4[%c0_117, %c0_118, %c0_119] : memref<1x4x2xf32, #tpu.memory_space<vmem>>, vector<1x4x2xf32>
      tpu.vector_store %arg4[%c0_117, %c0_118, %c0_119], %136 {strides = array<i32>} : memref<1x4x2xf32, #tpu.memory_space<vmem>>, vector<1x4x2xf32>,
    } else {
    }
    %c0 = arith.constant 0 : index
    %c0_1 = arith.constant 0 : index
    %3 = memref.load %arg3[%c0, %c0_1] : memref<4x4xf32, #tpu.memory_space<smem>>
    %c0_2 = arith.constant 0 : index
    %c0_3 = arith.constant 0 : index
    %c0_4 = arith.constant 0 : index
    %c0_5 = arith.constant 0 : index
    %4 = vector.load %arg2[%c0_2, %c0_3, %c0_4, %c0_5] : memref<2x4x2x128xf32, #tpu.memory_space<vmem>>, vector<2x1x2x128xf32>
    %5 = vector.shape_cast %4 : vector<2x1x2x128xf32> to vector<2x2x128xf32>
    %6 = vector.broadcast %3 : f32 to vector<2x2x128xf32>
    %7 = arith.mulf %6, %5 : vector<2x2x128xf32>
    %c0_6 = arith.constant 0 : index
    %c1 = arith.constant 1 : index
    %8 = memref.load %arg3[%c0_6, %c1] : memref<4x4xf32, #tpu.memory_space<smem>>
    %c0_7 = arith.constant 0 : index
    %c1_8 = arith.constant 1 : index
    %c0_9 = arith.constant 0 : index
    %c0_10 = arith.constant 0 : index
    %9 = vector.load %arg2[%c0_7, %c1_8, %c0_9, %c0_10] : memref<2x4x2x128xf32, #tpu.memory_space<vmem>>, vector<2x1x2x128xf32>
    %10 = vector.shape_cast %9 : vector<2x1x2x128xf32> to vector<2x2x128xf32>
    %11 = vector.broadcast %8 : f32 to vector<2x2x128xf32>
    %12 = arith.mulf %11, %10 : vector<2x2x128xf32>
    %13 = arith.addf %7, %12 : vector<2x2x128xf32>
    %c0_11 = arith.constant 0 : index
    %c2 = arith.constant 2 : index
    %14 = memref.load %arg3[%c0_11, %c2] : memref<4x4xf32, #tpu.memory_space<smem>>
    %c0_12 = arith.constant 0 : index
    %c2_13 = arith.constant 2 : index
    %c0_14 = arith.constant 0 : index
    %c0_15 = arith.constant 0 : index
    %15 = vector.load %arg2[%c0_12, %c2_13, %c0_14, %c0_15] : memref<2x4x2x128xf32, #tpu.memory_space<vmem>>, vector<2x1x2x128xf32>
    %16 = vector.shape_cast %15 : vector<2x1x2x128xf32> to vector<2x2x128xf32>
    %17 = vector.broadcast %14 : f32 to vector<2x2x128xf32>
    %18 = arith.mulf %17, %16 : vector<2x2x128xf32>
    %19 = arith.addf %13, %18 : vector<2x2x128xf32>
    %c0_16 = arith.constant 0 : index
    %c3 = arith.constant 3 : index
    %20 = memref.load %arg3[%c0_16, %c3] : memref<4x4xf32, #tpu.memory_space<smem>>
    %c0_17 = arith.constant 0 : index
    %c3_18 = arith.constant 3 : index
    %c0_19 = arith.constant 0 : index
    %c0_20 = arith.constant 0 : index
    %21 = vector.load %arg2[%c0_17, %c3_18, %c0_19, %c0_20] : memref<2x4x2x128xf32, #tpu.memory_space<vmem>>, vector<2x1x2x128xf32>
    %22 = vector.shape_cast %21 : vector<2x1x2x128xf32> to vector<2x2x128xf32>
    %23 = vector.broadcast %20 : f32 to vector<2x2x128xf32>
    %24 = arith.mulf %23, %22 : vector<2x2x128xf32>
    %25 = arith.addf %19, %24 : vector<2x2x128xf32>
    %cst = arith.constant dense<0.000000e+00> : vector<2x128xf32>
    %26 = vector.multi_reduction <add>, %25, %cst [0] : vector<2x2x128xf32> to vector<2x128xf32>
    %27 = arith.mulf %25, %25 : vector<2x2x128xf32>
    %cst_21 = arith.constant dense<0.000000e+00> : vector<2x128xf32>
    %28 = vector.multi_reduction <add>, %27, %cst_21 [0] : vector<2x2x128xf32> to vector<2x128xf32>
    %cst_22 = arith.constant dense<0.000000e+00> : vector<128xf32>
    %29 = vector.multi_reduction <add>, %26, %cst_22 [0] : vector<2x128xf32> to vector<128xf32>
    %30 = vector.shape_cast %29 : vector<128xf32> to vector<1x128xf32>
    %cst_23 = arith.constant dense<0.000000e+00> : vector<128xf32>
    %31 = vector.multi_reduction <add>, %28, %cst_23 [0] : vector<2x128xf32> to vector<128xf32>
    %32 = vector.shape_cast %31 : vector<128xf32> to vector<1x128xf32>
    %c1_24 = arith.constant 1 : index
    %c0_25 = arith.constant 0 : index
    %33 = memref.load %arg3[%c1_24, %c0_25] : memref<4x4xf32, #tpu.memory_space<smem>>
    %c0_26 = arith.constant 0 : index
    %c0_27 = arith.constant 0 : index
    %c0_28 = arith.constant 0 : index
    %c0_29 = arith.constant 0 : index
    %34 = vector.load %arg2[%c0_26, %c0_27, %c0_28, %c0_29] : memref<2x4x2x128xf32, #tpu.memory_space<vmem>>, vector<2x1x2x128xf32>
    %35 = vector.shape_cast %34 : vector<2x1x2x128xf32> to vector<2x2x128xf32>
    %36 = vector.broadcast %33 : f32 to vector<2x2x128xf32>
    %37 = arith.mulf %36, %35 : vector<2x2x128xf32>
    %c1_30 = arith.constant 1 : index
    %c1_31 = arith.constant 1 : index
    %38 = memref.load %arg3[%c1_30, %c1_31] : memref<4x4xf32, #tpu.memory_space<smem>>
    %c0_32 = arith.constant 0 : index
    %c1_33 = arith.constant 1 : index
    %c0_34 = arith.constant 0 : index
    %c0_35 = arith.constant 0 : index
    %39 = vector.load %arg2[%c0_32, %c1_33, %c0_34, %c0_35] : memref<2x4x2x128xf32, #tpu.memory_space<vmem>>, vector<2x1x2x128xf32>
    %40 = vector.shape_cast %39 : vector<2x1x2x128xf32> to vector<2x2x128xf32>
    %41 = vector.broadcast %38 : f32 to vector<2x2x128xf32>
    %42 = arith.mulf %41, %40 : vector<2x2x128xf32>
    %43 = arith.addf %37, %42 : vector<2x2x128xf32>
    %c1_36 = arith.constant 1 : index
    %c2_37 = arith.constant 2 : index
    %44 = memref.load %arg3[%c1_36, %c2_37] : memref<4x4xf32, #tpu.memory_space<smem>>
    %c0_38 = arith.constant 0 : index
    %c2_39 = arith.constant 2 : index
    %c0_40 = arith.constant 0 : index
    %c0_41 = arith.constant 0 : index
    %45 = vector.load %arg2[%c0_38, %c2_39, %c0_40, %c0_41] : memref<2x4x2x128xf32, #tpu.memory_space<vmem>>, vector<2x1x2x128xf32>
    %46 = vector.shape_cast %45 : vector<2x1x2x128xf32> to vector<2x2x128xf32>
    %47 = vector.broadcast %44 : f32 to vector<2x2x128xf32>
    %48 = arith.mulf %47, %46 : vector<2x2x128xf32>
    %49 = arith.addf %43, %48 : vector<2x2x128xf32>
    %c1_42 = arith.constant 1 : index
    %c3_43 = arith.constant 3 : index
    %50 = memref.load %arg3[%c1_42, %c3_43] : memref<4x4xf32, #tpu.memory_space<smem>>
    %c0_44 = arith.constant 0 : index
    %c3_45 = arith.constant 3 : index
    %c0_46 = arith.constant 0 : index
    %c0_47 = arith.constant 0 : index
    %51 = vector.load %arg2[%c0_44, %c3_45, %c0_46, %c0_47] : memref<2x4x2x128xf32, #tpu.memory_space<vmem>>, vector<2x1x2x128xf32>
    %52 = vector.shape_cast %51 : vector<2x1x2x128xf32> to vector<2x2x128xf32>
    %53 = vector.broadcast %50 : f32 to vector<2x2x128xf32>
    %54 = arith.mulf %53, %52 : vector<2x2x128xf32>
    %55 = arith.addf %49, %54 : vector<2x2x128xf32>
    %cst_48 = arith.constant dense<0.000000e+00> : vector<2x128xf32>
    %56 = vector.multi_reduction <add>, %55, %cst_48 [0] : vector<2x2x128xf32> to vector<2x128xf32>
    %57 = arith.mulf %55, %55 : vector<2x2x128xf32>
    %cst_49 = arith.constant dense<0.000000e+00> : vector<2x128xf32>
    %58 = vector.multi_reduction <add>, %57, %cst_49 [0] : vector<2x2x128xf32> to vector<2x128xf32>
    %cst_50 = arith.constant dense<0.000000e+00> : vector<128xf32>
    %59 = vector.multi_reduction <add>, %56, %cst_50 [0] : vector<2x128xf32> to vector<128xf32>
    %60 = vector.shape_cast %59 : vector<128xf32> to vector<1x128xf32>
    %cst_51 = arith.constant dense<0.000000e+00> : vector<128xf32>
    %61 = vector.multi_reduction <add>, %58, %cst_51 [0] : vector<2x128xf32> to vector<128xf32>
    %62 = vector.shape_cast %61 : vector<128xf32> to vector<1x128xf32>
    %c2_52 = arith.constant 2 : index
    %c0_53 = arith.constant 0 : index
    %63 = memref.load %arg3[%c2_52, %c0_53] : memref<4x4xf32, #tpu.memory_space<smem>>
    %c0_54 = arith.constant 0 : index
    %c0_55 = arith.constant 0 : index
    %c0_56 = arith.constant 0 : index
    %c0_57 = arith.constant 0 : index
    %64 = vector.load %arg2[%c0_54, %c0_55, %c0_56, %c0_57] : memref<2x4x2x128xf32, #tpu.memory_space<vmem>>, vector<2x1x2x128xf32>
    %65 = vector.shape_cast %64 : vector<2x1x2x128xf32> to vector<2x2x128xf32>
    %66 = vector.broadcast %63 : f32 to vector<2x2x128xf32>
    %67 = arith.mulf %66, %65 : vector<2x2x128xf32>
    %c2_58 = arith.constant 2 : index
    %c1_59 = arith.constant 1 : index
    %68 = memref.load %arg3[%c2_58, %c1_59] : memref<4x4xf32, #tpu.memory_space<smem>>
    %c0_60 = arith.constant 0 : index
    %c1_61 = arith.constant 1 : index
    %c0_62 = arith.constant 0 : index
    %c0_63 = arith.constant 0 : index
    %69 = vector.load %arg2[%c0_60, %c1_61, %c0_62, %c0_63] : memref<2x4x2x128xf32, #tpu.memory_space<vmem>>, vector<2x1x2x128xf32>
    %70 = vector.shape_cast %69 : vector<2x1x2x128xf32> to vector<2x2x128xf32>
    %71 = vector.broadcast %68 : f32 to vector<2x2x128xf32>
    %72 = arith.mulf %71, %70 : vector<2x2x128xf32>
    %73 = arith.addf %67, %72 : vector<2x2x128xf32>
    %c2_64 = arith.constant 2 : index
    %c2_65 = arith.constant 2 : index
    %74 = memref.load %arg3[%c2_64, %c2_65] : memref<4x4xf32, #tpu.memory_space<smem>>
    %c0_66 = arith.constant 0 : index
    %c2_67 = arith.constant 2 : index
    %c0_68 = arith.constant 0 : index
    %c0_69 = arith.constant 0 : index
    %75 = vector.load %arg2[%c0_66, %c2_67, %c0_68, %c0_69] : memref<2x4x2x128xf32, #tpu.memory_space<vmem>>, vector<2x1x2x128xf32>
    %76 = vector.shape_cast %75 : vector<2x1x2x128xf32> to vector<2x2x128xf32>
    %77 = vector.broadcast %74 : f32 to vector<2x2x128xf32>
    %78 = arith.mulf %77, %76 : vector<2x2x128xf32>
    %79 = arith.addf %73, %78 : vector<2x2x128xf32>
    %c2_70 = arith.constant 2 : index
    %c3_71 = arith.constant 3 : index
    %80 = memref.load %arg3[%c2_70, %c3_71] : memref<4x4xf32, #tpu.memory_space<smem>>
    %c0_72 = arith.constant 0 : index
    %c3_73 = arith.constant 3 : index
    %c0_74 = arith.constant 0 : index
    %c0_75 = arith.constant 0 : index
    %81 = vector.load %arg2[%c0_72, %c3_73, %c0_74, %c0_75] : memref<2x4x2x128xf32, #tpu.memory_space<vmem>>, vector<2x1x2x128xf32>
    %82 = vector.shape_cast %81 : vector<2x1x2x128xf32> to vector<2x2x128xf32>
    %83 = vector.broadcast %80 : f32 to vector<2x2x128xf32>
    %84 = arith.mulf %83, %82 : vector<2x2x128xf32>
    %85 = arith.addf %79, %84 : vector<2x2x128xf32>
    %cst_76 = arith.constant dense<0.000000e+00> : vector<2x128xf32>
    %86 = vector.multi_reduction <add>, %85, %cst_76 [0] : vector<2x2x128xf32> to vector<2x128xf32>
    %87 = arith.mulf %85, %85 : vector<2x2x128xf32>
    %cst_77 = arith.constant dense<0.000000e+00> : vector<2x128xf32>
    %88 = vector.multi_reduction <add>, %87, %cst_77 [0] : vector<2x2x128xf32> to vector<2x128xf32>
    %cst_78 = arith.constant dense<0.000000e+00> : vector<128xf32>
    %89 = vector.multi_reduction <add>, %86, %cst_78 [0] : vector<2x128xf32> to vector<128xf32>
    %90 = vector.shape_cast %89 : vector<128xf32> to vector<1x128xf32>
    %cst_79 = arith.constant dense<0.000000e+00> : vector<128xf32>
    %91 = vector.multi_reduction <add>, %88, %cst_79 [0] : vector<2x128xf32> to vector<128xf32>
    %92 = vector.shape_cast %91 : vector<128xf32> to vector<1x128xf32>
    %c3_80 = arith.constant 3 : index
    %c0_81 = arith.constant 0 : index
    %93 = memref.load %arg3[%c3_80, %c0_81] : memref<4x4xf32, #tpu.memory_space<smem>>
    %c0_82 = arith.constant 0 : index
    %c0_83 = arith.constant 0 : index
    %c0_84 = arith.constant 0 : index
    %c0_85 = arith.constant 0 : index
    %94 = vector.load %arg2[%c0_82, %c0_83, %c0_84, %c0_85] : memref<2x4x2x128xf32, #tpu.memory_space<vmem>>, vector<2x1x2x128xf32>
    %95 = vector.shape_cast %94 : vector<2x1x2x128xf32> to vector<2x2x128xf32>
    %96 = vector.broadcast %93 : f32 to vector<2x2x128xf32>
    %97 = arith.mulf %96, %95 : vector<2x2x128xf32>
    %c3_86 = arith.constant 3 : index
    %c1_87 = arith.constant 1 : index
    %98 = memref.load %arg3[%c3_86, %c1_87] : memref<4x4xf32, #tpu.memory_space<smem>>
    %c0_88 = arith.constant 0 : index
    %c1_89 = arith.constant 1 : index
    %c0_90 = arith.constant 0 : index
    %c0_91 = arith.constant 0 : index
    %99 = vector.load %arg2[%c0_88, %c1_89, %c0_90, %c0_91] : memref<2x4x2x128xf32, #tpu.memory_space<vmem>>, vector<2x1x2x128xf32>
    %100 = vector.shape_cast %99 : vector<2x1x2x128xf32> to vector<2x2x128xf32>
    %101 = vector.broadcast %98 : f32 to vector<2x2x128xf32>
    %102 = arith.mulf %101, %100 : vector<2x2x128xf32>
    %103 = arith.addf %97, %102 : vector<2x2x128xf32>
    %c3_92 = arith.constant 3 : index
    %c2_93 = arith.constant 2 : index
    %104 = memref.load %arg3[%c3_92, %c2_93] : memref<4x4xf32, #tpu.memory_space<smem>>
    %c0_94 = arith.constant 0 : index
    %c2_95 = arith.constant 2 : index
    %c0_96 = arith.constant 0 : index
    %c0_97 = arith.constant 0 : index
    %105 = vector.load %arg2[%c0_94, %c2_95, %c0_96, %c0_97] : memref<2x4x2x128xf32, #tpu.memory_space<vmem>>, vector<2x1x2x128xf32>
    %106 = vector.shape_cast %105 : vector<2x1x2x128xf32> to vector<2x2x128xf32>
    %107 = vector.broadcast %104 : f32 to vector<2x2x128xf32>
    %108 = arith.mulf %107, %106 : vector<2x2x128xf32>
    %109 = arith.addf %103, %108 : vector<2x2x128xf32>
    %c3_98 = arith.constant 3 : index
    %c3_99 = arith.constant 3 : index
    %110 = memref.load %arg3[%c3_98, %c3_99] : memref<4x4xf32, #tpu.memory_space<smem>>
    %c0_100 = arith.constant 0 : index
    %c3_101 = arith.constant 3 : index
    %c0_102 = arith.constant 0 : index
    %c0_103 = arith.constant 0 : index
    %111 = vector.load %arg2[%c0_100, %c3_101, %c0_102, %c0_103] : memref<2x4x2x128xf32, #tpu.memory_space<vmem>>, vector<2x1x2x128xf32>
    %112 = vector.shape_cast %111 : vector<2x1x2x128xf32> to vector<2x2x128xf32>
    %113 = vector.broadcast %110 : f32 to vector<2x2x128xf32>
    %114 = arith.mulf %113, %112 : vector<2x2x128xf32>
    %115 = arith.addf %109, %114 : vector<2x2x128xf32>
    %cst_104 = arith.constant dense<0.000000e+00> : vector<2x128xf32>
    %116 = vector.multi_reduction <add>, %115, %cst_104 [0] : vector<2x2x128xf32> to vector<2x128xf32>
    %117 = arith.mulf %115, %115 : vector<2x2x128xf32>
    %cst_105 = arith.constant dense<0.000000e+00> : vector<2x128xf32>
    %118 = vector.multi_reduction <add>, %117, %cst_105 [0] : vector<2x2x128xf32> to vector<2x128xf32>
    %cst_106 = arith.constant dense<0.000000e+00> : vector<128xf32>
    %119 = vector.multi_reduction <add>, %116, %cst_106 [0] : vector<2x128xf32> to vector<128xf32>
    %120 = vector.shape_cast %119 : vector<128xf32> to vector<1x128xf32>
    %cst_107 = arith.constant dense<0.000000e+00> : vector<128xf32>
    %121 = vector.multi_reduction <add>, %118, %cst_107 [0] : vector<2x128xf32> to vector<128xf32>
    %122 = vector.shape_cast %121 : vector<128xf32> to vector<1x128xf32>
    %123 = tpu.concatenate %30, %60, %90, %120 in 0 : vector<1x128xf32>, vector<1x128xf32>, vector<1x128xf32>, vector<1x128xf32> -> vector<4x128xf32>
    %cst_108 = arith.constant dense<0.000000e+00> : vector<4xf32>
    %124 = vector.multi_reduction <add>, %123, %cst_108 [1] : vector<4x128xf32> to vector<4xf32>
    %125 = vector.shape_cast %124 : vector<4xf32> to vector<4x1xf32>
    %126 = tpu.concatenate %32, %62, %92, %122 in 0 : vector<1x128xf32>, vector<1x128xf32>, vector<1x128xf32>, vector<1x128xf32> -> vector<4x128xf32>
    %cst_109 = arith.constant dense<0.000000e+00> : vector<4xf32>
    %127 = vector.multi_reduction <add>, %126, %cst_109 [1] : vector<4x128xf32> to vector<4xf32>
    %128 = vector.shape_cast %127 : vector<4xf32> to vector<4x1xf32>
    %c0_110 = arith.constant 0 : index
    %c0_111 = arith.constant 0 : index
    %c0_112 = arith.constant 0 : index
    %129 = vector.load %arg4[%c0_110, %c0_111, %c0_112] : memref<1x4x2xf32, #tpu.memory_space<vmem>>, vector<1x4x2xf32>
    %130 = vector.shape_cast %129 : vector<1x4x2xf32> to vector<4x2xf32>
    %131 = tpu.concatenate %125, %128 in 1 : vector<4x1xf32>, vector<4x1xf32> -> vector<4x2xf32>
    %132 = arith.addf %130, %131 : vector<4x2xf32>
    %c0_113 = arith.constant 0 : index
    %c0_114 = arith.constant 0 : index
    %c0_115 = arith.constant 0 : index
    %133 = vector.load %arg4[%c0_113, %c0_114, %c0_115] : memref<1x4x2xf32, #tpu.memory_space<vmem>>, vector<1x4x2xf32>
    %134 = vector.shape_cast %133 : vector<1x4x2xf32> to vector<4x2xf32>
    %135 = vector.shape_cast %132 : vector<4x2xf32> to vector<1x4x2xf32>
    tpu.vector_store %arg4[%c0_113, %c0_114, %c0_115], %135 {strides = array<i32>} : memref<1x4x2xf32, #tpu.memory_space<vmem>>, vector<1x4x2xf32>,
    return
  }
  func.func @transform_0(%arg0: i32, %arg1: i32) -> (i32, i32, i32, i32) {
    %c0_i32 = arith.constant 0 : i32
    %c0_i32_0 = arith.constant 0 : i32
    %c0_i32_1 = arith.constant 0 : i32
    return %arg0, %c0_i32, %arg1, %c0_i32_0 : i32, i32, i32, i32
  }
  func.func @transform_1(%arg0: i32, %arg1: i32) -> (i32, i32) {
    %c0_i32 = arith.constant 0 : i32
    %c0_i32_0 = arith.constant 0 : i32
    %c0_i32_1 = arith.constant 0 : i32
    return %c0_i32, %c0_i32_0 : i32, i32
  }
  func.func @transform_2(%arg0: i32, %arg1: i32) -> (i32, i32, i32) {
    %c0_i32 = arith.constant 0 : i32
    %c0_i32_0 = arith.constant 0 : i32
    %c0_i32_1 = arith.constant 0 : i32
    return %arg0, %c0_i32, %c0_i32_0 : i32, i32, i32
  }
}

</mosaic_0001>

<llo_original>
// kernel: tpu_custom_call.1
$region0: #{tpu_custom_call.1}
  #allocation0 [shape = 'u32[]', space=smem, size = 0x4, offset = 0x4, fixed_abs, tag = 'smem constant byte address 0x4 - core index']
  #allocation1 [shape = 'u32[144,128]{1,0:T(1,128)}', space=vmem, size = 0x12000, scoped, tag = 'internal scratch']
  %s0 = inlined_call_operand.hbm [shape: f32[2,4,2,128], index: 0, kind: input, shape index: {}]
  %s1 = inlined_call_operand.hbm [shape: f32[4,4], index: 1, kind: input, shape index: {}]
  %s2 = inlined_call_operand.vmem [shape: f32[1,4,2], index: 2, kind: output, shape index: {}]
  %s3 = sld [smem:[#allocation0]]
  $region30: #{tpu_custom_call.1} parent=0
    _
  %s5 = ssub.s32 1, %s3
  %s6 = scalar_select 0, %s5, %s3
  $region1: #{tpu_custom_call.1} parent=0
    #allocation2 [shape = 'u8[8192]{0}', space=vmem, size = 0x2000, scoped, tag = 'input window, operand 0, single buffered']
    #allocation3 [shape = 's32[1]{0}', space=sflag, size = 0x4, scoped, tag = 'scoped memory for tpu_custom_call.1']
    #allocation4 [shape = 's32[1]{0}', space=sflag, size = 0x4, scoped, tag = 'scoped memory for tpu_custom_call.1']
    #allocation5 [shape = 'u8[2048]{0}', space=smem, size = 0x800, scoped, tag = 'input window, operand 1, single buffered']
    %7 = vsyncpa [#allocation3], 0
    %8 = vsyncpa [#allocation4], 0
    // Predicated region
    $region2: #{tpu_custom_call.1} parent=1 // pred_check
      _
    $region3: #{tpu_custom_call.1} parent=1 // pred_check_branch
      %10 = sbr.rel (0) target = $region5
    $region4: #{tpu_custom_call.1} parent=1 // pred_region
      %s12 = ssub.s32 256, 256
      %13 = vsyncadd [#allocation3], %s12
      %s14 = sshll.u32 [#allocation2], 4
      %s15 = int_to_ptr.vmem [resolvable:$true] %s14
      %20 = dma.hbm_to_vmem [thread:$0]  %s0, 256, %s15, [#allocation3], 32, 32, 2
    $region5: #{tpu_custom_call.1} parent=1 // pred_fallthru
      _
    // Predicated region
    $region6: #{tpu_custom_call.1} parent=1 // pred_check
      _
    $region7: #{tpu_custom_call.1} parent=1 // pred_check_branch
      %22 = sbr.rel (0) target = $region9
    $region8: #{tpu_custom_call.1} parent=1 // pred_region
      %s24 = ssub.s32 64, 64
      %25 = vsyncadd [#allocation4], %s24
      %28 = dma.hbm_to_smem %s1, 64, [#allocation5], [#allocation4]
    $region9: #{tpu_custom_call.1} parent=1 // pred_fallthru
      _
    // Predicated region
    $region10: #{tpu_custom_call.1} parent=1 // pred_check
      _
    $region11: #{tpu_custom_call.1} parent=1 // pred_check_branch
      %30 = sbr.rel (0) target = $region13
    $region12: #{tpu_custom_call.1} parent=1 // pred_region
      %31 = dma.done [#allocation3], 256
    $region13: #{tpu_custom_call.1} parent=1 // pred_fallthru
      _
    // Predicated region
    $region14: #{tpu_custom_call.1} parent=1 // pred_check
      _
    $region15: #{tpu_custom_call.1} parent=1 // pred_check_branch
      %33 = sbr.rel (0) target = $region17
    $region16: #{tpu_custom_call.1} parent=1 // pred_region
      %34 = dma.done [#allocation4], 64
    $region17: #{tpu_custom_call.1} parent=1 // pred_fallthru
      _
    %35 = sfence
    %p36 = scmp.eq.s32.totalorder 0, 0
    // Predicated region
    $region18: #{tpu_custom_call.1} parent=1 // pred_check
      %p37 = pneg %p36
    $region19: #{tpu_custom_call.1} parent=1 // pred_check_branch
      %39 = sbr.rel (%p37) target = $region21
    $region20: #{tpu_custom_call.1} parent=1 // pred_region
      %vm40 = vcmask 11264
      %41 = vst.msk [vmem:[%s2] sm:$0xf] %vm40, 0.0
    $region21: #{tpu_custom_call.1} parent=1 // pred_fallthru
      _
    %s42 = sld [smem:[#allocation5]]
    %v43 = vld [vmem:[#allocation2] sm:$0x3]
    %v44 = vld [vmem:[#allocation2 + $0x8] sm:$0x3]
    %v45 = vstv %s42
    %v46 = vmul.f32 %v45, %v43
    %v47 = vmul.f32 %v45, %v44
    %s48 = sld [smem:[#allocation5 + $0x1]]
    %s49 = scalar_lea.vmem [#allocation2], 2
    %v50 = vld [vmem:[%s49] sm:$0x3]
    %v51 = vld [vmem:[%s49 + $0x8] sm:$0x3]
    %v52 = vstv %s48
    %v53 = vmul.f32 %v52, %v50
    %v54 = vmul.f32 %v52, %v51
    %v55 = vadd.f32 %v46, %v53
    %v56 = vadd.f32 %v47, %v54
    %s57 = sld [smem:[#allocation5 + $0x2]]
    %s58 = scalar_lea.vmem [#allocation2], 4
    %v59 = vld [vmem:[%s58] sm:$0x3]
    %v60 = vld [vmem:[%s58 + $0x8] sm:$0x3]
    %v61 = vstv %s57
    %v62 = vmul.f32 %v61, %v59
    %v63 = vmul.f32 %v61, %v60
    %v64 = vadd.f32 %v55, %v62
    %v65 = vadd.f32 %v56, %v63
    %s66 = sld [smem:[#allocation5 + $0x3]]
    %s67 = scalar_lea.vmem [#allocation2], 6
    %v68 = vld [vmem:[%s67] sm:$0x3]
    %v69 = vld [vmem:[%s67 + $0x8] sm:$0x3]
    %v70 = vstv %s66
    %v71 = vmul.f32 %v70, %v68
    %v72 = vmul.f32 %v70, %v69
    %v73 = vadd.f32 %v64, %v71
    %v74 = vadd.f32 %v65, %v72
    %vm75 = vcmask 1041408
    %v76 = vsel %vm75, %v73, 0.0
    %v77 = vsel %vm75, %v74, 0.0
    %v78 = vadd.f32 %v76, %v77
    %v79 = vmul.f32 %v73, %v73
    %v80 = vmul.f32 %v74, %v74
    %v81 = vsel %vm75, %v79, 0.0
    %v82 = vsel %vm75, %v80, 0.0
    %v83 = vadd.f32 %v81, %v82
    %v84 = vsel %vm75, %v78, 0.0
    %v85 = vrot.slane %v84, 4
    %v86 = vadd.f32 %v84, %v85
    %v87 = vrot.slane %v86, 2
    %v88 = vadd.f32 %v86, %v87
    %v89 = vrot.slane %v88, 1
    %v90 = vadd.f32 %v88, %v89
    %v91 = vsel %vm75, %v83, 0.0
    %v92 = vrot.slane %v91, 4
    %v93 = vadd.f32 %v91, %v92
    %v94 = vrot.slane %v93, 2
    %v95 = vadd.f32 %v93, %v94
    %v96 = vrot.slane %v95, 1
    %v97 = vadd.f32 %v95, %v96
    %s98 = sld [smem:[#allocation5 + $0x80]]
    %v99 = vstv %s98
    %v100 = vmul.f32 %v99, %v43
    %v101 = vmul.f32 %v99, %v44
    %s102 = sld [smem:[#allocation5 + $0x81]]
    %v103 = vstv %s102
    %v104 = vmul.f32 %v103, %v50
    %v105 = vmul.f32 %v103, %v51
    %v106 = vadd.f32 %v100, %v104
    %v107 = vadd.f32 %v101, %v105
    %s108 = sld [smem:[#allocation5 + $0x82]]
    %v109 = vstv %s108
    %v110 = vmul.f32 %v109, %v59
    %v111 = vmul.f32 %v109, %v60
    %v112 = vadd.f32 %v106, %v110
    %v113 = vadd.f32 %v107, %v111
    %s114 = sld [smem:[#allocation5 + $0x83]]
    %v115 = vstv %s114
    %v116 = vmul.f32 %v115, %v68
    %v117 = vmul.f32 %v115, %v69
    %v118 = vadd.f32 %v112, %v116
    %v119 = vadd.f32 %v113, %v117
    %v120 = vsel %vm75, %v118, 0.0
    %v121 = vsel %vm75, %v119, 0.0
    %v122 = vadd.f32 %v120, %v121
    %v123 = vmul.f32 %v118, %v118
    %v124 = vmul.f32 %v119, %v119
    %v125 = vsel %vm75, %v123, 0.0
    %v126 = vsel %vm75, %v124, 0.0
    %v127 = vadd.f32 %v125, %v126
    %v128 = vsel %vm75, %v122, 0.0
    %v129 = vrot.slane %v128, 4
    %v130 = vadd.f32 %v128, %v129
    %v131 = vrot.slane %v130, 2
    %v132 = vadd.f32 %v130, %v131
    %v133 = vrot.slane %v132, 1
    %v134 = vadd.f32 %v132, %v133
    %v135 = vsel %vm75, %v127, 0.0
    %v136 = vrot.slane %v135, 4
    %v137 = vadd.f32 %v135, %v136
    %v138 = vrot.slane %v137, 2
    %v139 = vadd.f32 %v137, %v138
    %v140 = vrot.slane %v139, 1
    %v141 = vadd.f32 %v139, %v140
    %s142 = sld [smem:[#allocation5 + $0x100]]
    %v143 = vstv %s142
    %v144 = vmul.f32 %v143, %v43
    %v145 = vmul.f32 %v143, %v44
    %s146 = sld [smem:[#allocation5 + $0x101]]
    %v147 = vstv %s146
    %v148 = vmul.f32 %v147, %v50
    %v149 = vmul.f32 %v147, %v51
    %v150 = vadd.f32 %v144, %v148
    %v151 = vadd.f32 %v145, %v149
    %s152 = sld [smem:[#allocation5 + $0x102]]
    %v153 = vstv %s152
    %v154 = vmul.f32 %v153, %v59
    %v155 = vmul.f32 %v153, %v60
    %v156 = vadd.f32 %v150, %v154
    %v157 = vadd.f32 %v151, %v155
    %s158 = sld [smem:[#allocation5 + $0x103]]
    %v159 = vstv %s158
    %v160 = vmul.f32 %v159, %v68
    %v161 = vmul.f32 %v159, %v69
    %v162 = vadd.f32 %v156, %v160
    %v163 = vadd.f32 %v157, %v161
    %v164 = vsel %vm75, %v162, 0.0
    %v165 = vsel %vm75, %v163, 0.0
    %v166 = vadd.f32 %v164, %v165
    %v167 = vmul.f32 %v162, %v162
    %v168 = vmul.f32 %v163, %v163
    %v169 = vsel %vm75, %v167, 0.0
    %v170 = vsel %vm75, %v168, 0.0
    %v171 = vadd.f32 %v169, %v170
    %v172 = vsel %vm75, %v166, 0.0
    %v173 = vrot.slane %v172, 4
    %v174 = vadd.f32 %v172, %v173
    %v175 = vrot.slane %v174, 2
    %v176 = vadd.f32 %v174, %v175
    %v177 = vrot.slane %v176, 1
    %v178 = vadd.f32 %v176, %v177
    %v179 = vsel %vm75, %v171, 0.0
    %v180 = vrot.slane %v179, 4
    %v181 = vadd.f32 %v179, %v180
    %v182 = vrot.slane %v181, 2
    %v183 = vadd.f32 %v181, %v182
    %v184 = vrot.slane %v183, 1
    %v185 = vadd.f32 %v183, %v184
    %s186 = sld [smem:[#allocation5 + $0x180]]
    %v187 = vstv %s186
    %v188 = vmul.f32 %v187, %v43
    %v189 = vmul.f32 %v187, %v44
    %s190 = sld [smem:[#allocation5 + $0x181]]
    %v191 = vstv %s190
    %v192 = vmul.f32 %v191, %v50
    %v193 = vmul.f32 %v191, %v51
    %v194 = vadd.f32 %v188, %v192
    %v195 = vadd.f32 %v189, %v193
    %s196 = sld [smem:[#allocation5 + $0x182]]
    %v197 = vstv %s196
    %v198 = vmul.f32 %v197, %v59
    %v199 = vmul.f32 %v197, %v60
    %v200 = vadd.f32 %v194, %v198
    %v201 = vadd.f32 %v195, %v199
    %s202 = sld [smem:[#allocation5 + $0x183]]
    %v203 = vstv %s202
    %v204 = vmul.f32 %v203, %v68
    %v205 = vmul.f32 %v203, %v69
    %v206 = vadd.f32 %v200, %v204
    %v207 = vadd.f32 %v201, %v205
    %v208 = vsel %vm75, %v206, 0.0
    %v209 = vsel %vm75, %v207, 0.0
    %v210 = vadd.f32 %v208, %v209
    %v211 = vmul.f32 %v206, %v206
    %v212 = vmul.f32 %v207, %v207
    %v213 = vsel %vm75, %v211, 0.0
    %v214 = vsel %vm75, %v212, 0.0
    %v215 = vadd.f32 %v213, %v214
    %v216 = vsel %vm75, %v210, 0.0
    %v217 = vrot.slane %v216, 4
    %v218 = vadd.f32 %v216, %v217
    %v219 = vrot.slane %v218, 2
    %v220 = vadd.f32 %v218, %v219
    %v221 = vrot.slane %v220, 1
    %v222 = vadd.f32 %v220, %v221
    %v223 = vsel %vm75, %v215, 0.0
    %v224 = vrot.slane %v223, 4
    %v225 = vadd.f32 %v223, %v224
    %v226 = vrot.slane %v225, 2
    %v227 = vadd.f32 %v225, %v226
    %v228 = vrot.slane %v227, 1
    %v229 = vadd.f32 %v227, %v228
    %vm230 = vcmask 1040384
    %v231 = vsel %vm230, %v90, %v134
    %v232 = vsel %vm75, %v231, %v178
    %vm233 = vcmask 1042432
    %v234 = vsel %vm233, %v232, %v222
    %vm235 = vcmask 1043456
    %v236 = vsel %vm235, %v234, 0.0
    %237 = vadd.xlane.f32.xlu0 %v236
    %v238 = vpop.xlane.xlu0 %237
    %v239 = vsel %vm230, %v97, %v141
    %v240 = vsel %vm75, %v239, %v185
    %v241 = vsel %vm233, %v240, %v229
    %v242 = vsel %vm235, %v241, 0.0
    %243 = vadd.xlane.f32.xlu0 %v242
    %v244 = vpop.xlane.xlu0 %243
    %v245 = vld [vmem:[%s2] sm:$0xf]
    %vm246 = vcmask 7168
    %v247 = vsel %vm246, %v238, %v244
    %v248 = vadd.f32 %v245, %v247
    %vm249 = vcmask 11264
    %250 = vst.msk [vmem:[%s2] sm:$0xf] %vm249, %v248
    // Predicated region
    $region22: #{tpu_custom_call.1} parent=1 // pred_check
      _
    $region23: #{tpu_custom_call.1} parent=1 // pred_check_branch
      %252 = sbr.rel (0) target = $region25
    $region24: #{tpu_custom_call.1} parent=1 // pred_region
      _
    $region25: #{tpu_custom_call.1} parent=1 // pred_fallthru
      _
    // Predicated region
    $region26: #{tpu_custom_call.1} parent=1 // pred_check
      _
    $region27: #{tpu_custom_call.1} parent=1 // pred_check_branch
      %254 = sbr.rel (0) target = $region29
    $region28: #{tpu_custom_call.1} parent=1 // pred_region
      _
    $region29: #{tpu_custom_call.1} parent=1 // pred_fallthru
      _
    %255 = vsyncpa [#allocation3], 1
    %256 = vsyncpa [#allocation4], 1

</llo_original>
